<compile_context>
chip_gen: v6e
topology: v6e:2x2x1
jax: 0.10.0
libtpu: 0.0.40
codegen_flags: <defaults>
</compile_context>

<pallas_src>
import functools
import numpy as np

import jax
import jax.numpy as jnp
from jax.experimental import pallas as pl
from jax.experimental.pallas import tpu as pltpu

LN_EPS = 1e-5          # nn.LayerNorm default
_NEG_BIG = -1e30       # mask value for padded keys


def _round_up(x, m):
    return ((x + m - 1) // m) * m


def _gelu_exact(x):
    # nn.GELU() default ('none') = exact erf formulation
    return 0.5 * x * (1.0 + jax.lax.erf(x * (1.0 / np.sqrt(2.0))))


def _vmem_budget_bytes():
    """Usable VMEM budget (<= 75% of physical), safe on v5e/v6e/v7x."""
    cap = 64 * 1024 * 1024          # conservative default = v7x physical VMEM
    try:
        cap = int(pltpu.get_tpu_info().vmem_capacity_bytes)
    except Exception:
        pass
    return (cap * 3) // 4


# -------------------------------------------------------------------------
# Patch embedding: Conv2d(k=P, stride=P) expressed as (B*Np, C*P*P) @ (K, E)
# Row-tiled (cap 512) with a parallel grid; remainder rows zero-padded.
# -------------------------------------------------------------------------
def patch_embed_kernel(x_ref, w_ref, b_ref, o_ref):
    o_ref[...] = (
        jnp.dot(x_ref[...], w_ref[...], preferred_element_type=jnp.float32)
        + b_ref[...]
    )


def patch_embed(patches_2d, w, b):
    M, K = patches_2d.shape
    E = w.shape[1]
    tm = min(512, _round_up(M, 8))
    grid_m = pl.cdiv(M, tm)
    M_pad = grid_m * tm
    if M_pad != M:
        patches_2d = jnp.pad(patches_2d, ((0, M_pad - M), (0, 0)))
    # TODO(synk): for very large K (big patches / many channels) add a K grid
    # axis with an f32 accumulator scratch; unnecessary at these sizes.
    out = pl.pallas_call(
        patch_embed_kernel,
        out_shape=jax.ShapeDtypeStruct((M_pad, E), jnp.float32),
        grid=(grid_m,),
        in_specs=[
            pl.BlockSpec((tm, K), lambda i: (i, 0)),
            pl.BlockSpec((K, E), lambda i: (0, 0)),
            pl.BlockSpec((1, E), lambda i: (0, 0)),
        ],
        out_specs=pl.BlockSpec((tm, E), lambda i: (i, 0)),
        compiler_params=pltpu.CompilerParams(
            dimension_semantics=("parallel",)),
    )(patches_2d, w, b)
    return out[:M] if M_pad != M else out


# -------------------------------------------------------------------------
# Encoder stack: ONE kernel, grid = (batch_tile, layer).
#   - activation block (TB, S, D) resident in VMEM across the layer axis
#   - per-layer weights indexed by the layer grid axis (auto-prefetched) and
#     streamed only B/TB times in total
# -------------------------------------------------------------------------
_ENC_PARAM_ORDER = (
    "ln1w", "ln1b", "wq", "bq", "wk", "bk", "wv", "bv", "wo", "bo",
    "ln2w", "ln2b", "w1", "b1", "w2", "b2",
)


def encoder_stack_kernel(*refs, n_heads, emit_attn, mm_dtype, s_valid):
    (x_ref, pos_ref,
     ln1w_ref, ln1b_ref,
     wq_ref, bq_ref, wk_ref, bk_ref, wv_ref, bv_ref, wo_ref, bo_ref,
     ln2w_ref, ln2b_ref, w1_ref, b1_ref, w2_ref, b2_ref,
     out_ref) = refs[:19]
    attn_ref = refs[19] if emit_attn else None

    l = pl.program_id(1)

    # Layer 0: seed the resident activation block (fused pos_emb add).
    @pl.when(l == 0)
    def _():
        out_ref[...] = x_ref[...] + pos_ref[...]

    TB, S, D = out_ref.shape
    nh = n_heads
    dk = D // nh
    N = TB * S

    x = out_ref[...].reshape(N, D)            # (N, D) f32, resident across layers

    def layer_norm(z, w_ref, b_ref):          # f32 statistics
        mu = jnp.mean(z, axis=-1, keepdims=True)
        var = jnp.mean(jnp.square(z - mu), axis=-1, keepdims=True)
        return (z - mu) * jax.lax.rsqrt(var + LN_EPS) * w_ref[0] + b_ref[0]

    # ---- LayerNorm 1 + multi-head self attention ----
    xn = layer_norm(x, ln1w_ref, ln1b_ref).astype(mm_dtype)      # (N, D)

    scale = 1.0 / np.sqrt(dk)
    key_mask = None
    if s_valid < S:
        kidx = jax.lax.broadcasted_iota(jnp.int32, (1, 1, S), 2)
        key_mask = kidx < s_valid

    ctx_parts = []
    probs = [] if emit_attn else None
    for h in range(nh):
        # Per-head projections with full-depth-D contraction (no lane slicing
        # of activations, no head stacks).
        qh = (jnp.dot(xn, wq_ref[0, h], preferred_element_type=jnp.float32)
              + bq_ref[0, h]) * scale
        kh = (jnp.dot(xn, wk_ref[0, h], preferred_element_type=jnp.float32)
              + bk_ref[0, h])
        vh = (jnp.dot(xn, wv_ref[0, h], preferred_element_type=jnp.float32)
              + bv_ref[0, h])
        qh = qh.reshape(TB, S, dk).astype(mm_dtype)
        kh = kh.reshape(TB, S, dk).astype(mm_dtype)
        vh = vh.reshape(TB, S, dk).astype(mm_dtype)

        s_h = jnp.einsum("bqd,bkd->bqk", qh, kh,
                         preferred_element_type=jnp.float32)      # (TB, S, S)
        if key_mask is not None:
            s_h = jnp.where(key_mask, s_h, _NEG_BIG)
        s_h = s_h - jnp.max(s_h, axis=-1, keepdims=True)
        p_h = jnp.exp(s_h)
        p_h = p_h * pl.reciprocal(jnp.sum(p_h, axis=-1, keepdims=True),
                                  approx=True)
        if emit_attn:
            probs.append(p_h.astype(attn_ref.dtype))

        ctx_h = jnp.einsum("bqk,bkd->bqd", p_h.astype(mm_dtype), vh,
                           preferred_element_type=jnp.float32)    # (TB, S, dk)
        ctx_parts.append(ctx_h.reshape(N, dk))

    if emit_attn:
        attn_ref[0] = jnp.stack(probs, axis=1)    # (TB, H, S, S), one bf16 store

    # Single full-depth (D, D) output projection on the concatenated context
    # (equivalent to transpose(1,2).flatten(2) @ Wo).
    ctx = jnp.concatenate(ctx_parts, axis=-1).astype(mm_dtype)    # (N, D)
    attn_out = (jnp.dot(ctx, wo_ref[0], preferred_element_type=jnp.float32)
                + bo_ref[0])

    res1 = attn_out + x

    # ---- LayerNorm 2 + MLP (Linear -> GELU -> Linear) ----
    # TODO(synk): for ViT-L/H-scale D on v7x, stream w1/w2 in hidden-dim chunks
    # to keep double-buffered FFN weights inside the 64 MiB VMEM budget.
    xn2 = layer_norm(res1, ln2w_ref, ln2b_ref).astype(mm_dtype)
    h1 = (jnp.dot(xn2, w1_ref[0], preferred_element_type=jnp.float32)
          + b1_ref[0])
    h1 = _gelu_exact(h1)
    h2 = (jnp.dot(h1.astype(mm_dtype), w2_ref[0],
                  preferred_element_type=jnp.float32) + b2_ref[0])

    out_ref[...] = (res1 + h2).reshape(TB, S, D)


def _encoder_vmem_need_bytes(TB, S, D, nh, w_args, emit_attn, attn_itemsize):
    per_layer_w = sum(int(np.prod(w.shape[1:])) * w.dtype.itemsize
                      for w in w_args)
    act = TB * S * D * 4
    attn_blk = TB * nh * S * S * attn_itemsize if emit_attn else 0
    dff = 4 * D
    interm = (4 * TB * S * D * 4            # xn, res1, attn_out, ctx
              + 3 * TB * S * (D // nh) * 4  # per-head q, k, v
              + 2 * TB * S * S * 4          # scores + probs (one head live)
              + 2 * TB * S * dff * 4)       # MLP hidden (f32 + bf16 copy)
    return (2 * per_layer_w                 # double-buffered per-layer weights
            + 3 * act + 2 * S * D * 4       # x-in (x2), resident out, pos
            + 2 * attn_blk
            + interm)


def _pick_batch_tile(B, S, D, nh, enc, emit_attn, attn_itemsize):
    """Largest batch tile (from 8/4/2/1 dividing B) whose footprint fits VMEM."""
    w_args = [enc[name] for name in _ENC_PARAM_ORDER]
    budget = _vmem_budget_bytes()
    for tb in (8, 4, 2, 1):
        if B % tb == 0 and _encoder_vmem_need_bytes(
                tb, S, D, nh, w_args, emit_attn, attn_itemsize) <= budget:
            return tb
    return 1


def encoder_stack(tokens, pos_emb, enc, n_heads, *, s_valid, batch_tile,
                  emit_attn=True, attn_dtype=jnp.bfloat16):
    Bp, S, D = tokens.shape
    TB = batch_tile
    assert Bp % TB == 0
    L = enc["wq"].shape[0]
    nh = n_heads
    w_args = [enc[name] for name in _ENC_PARAM_ORDER]

    in_specs = [
        pl.BlockSpec((TB, S, D), lambda b, l: (b, 0, 0)),    # token block
        pl.BlockSpec((1, S, D), lambda b, l: (0, 0, 0)),     # pos_emb (resident)
    ]
    for w in w_args:
        blk = (1,) + tuple(w.shape[1:])
        nd = w.ndim
        in_specs.append(
            pl.BlockSpec(blk, lambda b, l, _n=nd: (l,) + (0,) * (_n - 1)))

    if emit_attn:
        out_shape = (jax.ShapeDtypeStruct((Bp, S, D), jnp.float32),
                     jax.ShapeDtypeStruct((L, Bp, nh, S, S), attn_dtype))
        out_specs = (pl.BlockSpec((TB, S, D), lambda b, l: (b, 0, 0)),
                     pl.BlockSpec((1, TB, nh, S, S),
                                  lambda b, l: (l, b, 0, 0, 0)))
    else:
        out_shape = jax.ShapeDtypeStruct((Bp, S, D), jnp.float32)
        out_specs = pl.BlockSpec((TB, S, D), lambda b, l: (b, 0, 0))

    budget = _vmem_budget_bytes()
    need = _encoder_vmem_need_bytes(TB, S, D, nh, w_args, emit_attn,
                                    jnp.dtype(attn_dtype).itemsize)
    vmem_limit = int(min(max(int(need * 1.25), 32 * 1024 * 1024), budget))

    kernel = functools.partial(encoder_stack_kernel, n_heads=nh,
                               emit_attn=emit_attn,
                               mm_dtype=enc["wq"].dtype, s_valid=s_valid)

    res = pl.pallas_call(
        kernel,
        out_shape=out_shape,
        grid=(Bp // TB, L),                 # layer axis last: sequential / resident
        in_specs=in_specs,
        out_specs=out_specs,
        compiler_params=pltpu.CompilerParams(
            dimension_semantics=("parallel", "arbitrary"),
            vmem_limit_bytes=vmem_limit),
    )(tokens, pos_emb, *w_args)

    if emit_attn:
        return res
    return res, None


# -------------------------------------------------------------------------
# MLP head: LayerNorm + Linear on the CLS token
# -------------------------------------------------------------------------
def head_kernel(x_ref, lnw_ref, lnb_ref, w_ref, b_ref, o_ref):
    x = x_ref[...]
    mu = jnp.mean(x, axis=-1, keepdims=True)
    var = jnp.mean(jnp.square(x - mu), axis=-1, keepdims=True)
    xn = (x - mu) * jax.lax.rsqrt(var + LN_EPS) * lnw_ref[...] + lnb_ref[...]
    o_ref[...] = (
        jnp.dot(xn.astype(w_ref.dtype), w_ref[...],
                preferred_element_type=jnp.float32) + b_ref[...]
    )


def mlp_head(cls_tok, lnw, lnb, w, b):
    B, D = cls_tok.shape
    C = w.shape[1]
    return pl.pallas_call(
        head_kernel,
        out_shape=jax.ShapeDtypeStruct((B, C), jnp.float32),
        grid=(1,),
        in_specs=[
            pl.BlockSpec((B, D), lambda i: (0, 0)),
            pl.BlockSpec((1, D), lambda i: (0, 0)),
            pl.BlockSpec((1, D), lambda i: (0, 0)),
            pl.BlockSpec((D, C), lambda i: (0, 0)),
            pl.BlockSpec((1, C), lambda i: (0, 0)),
        ],
        out_specs=pl.BlockSpec((B, C), lambda i: (0, 0)),
        compiler_params=pltpu.CompilerParams(
            dimension_semantics=("arbitrary",)),
    )(cls_tok, lnw, lnb, w, b)


# -------------------------------------------------------------------------
# Parameter init (deterministic, shapes match the PyTorch module __init__).
# Matmul weights are stored in bf16; Q/K/V weights pre-split per head.
# -------------------------------------------------------------------------
def init_params(key, in_channels, emb_dim, patch_size, num_patches,
                num_encoder, n_class, n_heads, mm_dtype=jnp.bfloat16):
    D = emb_dim
    L = num_encoder
    nh = n_heads
    assert D % nh == 0
    dk = D // nh

    keys = iter(jax.random.split(key, 4 + 6 * L))

    def lin_w(k, fi, fo):
        return jax.random.normal(k, (fi, fo), jnp.float32) * 0.02

    K = in_channels * patch_size * patch_size
    params = {
        # conv weight stored as (K, E); K iterates (c, ph, pw) row-major,
        # matching the NCHW patch extraction (equivalent to Conv2d k=stride=P).
        "patch_w": lin_w(next(keys), K, D).astype(mm_dtype),
        "patch_b": jnp.zeros((1, D), jnp.float32),
        "cls_token": jax.random.normal(next(keys), (1, 1, D), jnp.float32) * 0.02,
        "pos_emb": jax.random.normal(next(keys), (1, num_patches + 1, D),
                                     jnp.float32) * 0.02,
    }

    enc = {
        "ln1w": jnp.ones((L, 1, D), jnp.float32),
        "ln1b": jnp.zeros((L, 1, D), jnp.float32),
        "ln2w": jnp.ones((L, 1, D), jnp.float32),
        "ln2b": jnp.zeros((L, 1, D), jnp.float32),
        "bq": jnp.zeros((L, nh, 1, dk), jnp.float32),
        "bk": jnp.zeros((L, nh, 1, dk), jnp.float32),
        "bv": jnp.zeros((L, nh, 1, dk), jnp.float32),
        "bo": jnp.zeros((L, 1, D), jnp.float32),
        "b1": jnp.zeros((L, 1, 4 * D), jnp.float32),
        "b2": jnp.zeros((L, 1, D), jnp.float32),
    }
    wq, wk, wv, wo, w1, w2 = [], [], [], [], [], []
    for _ in range(L):
        wq.append(lin_w(next(keys), D, D))
        wk.append(lin_w(next(keys), D, D))
        wv.append(lin_w(next(keys), D, D))
        wo.append(lin_w(next(keys), D, D))
        w1.append(lin_w(next(keys), D, 4 * D))
        w2.append(lin_w(next(keys), 4 * D, D))

    def split_heads(ws):
        # (L, D_in, D_out) -> per-head (L, H, D_in, dk): head h = out cols h*dk..
        w = jnp.stack(ws)
        return w.reshape(L, D, nh, dk).transpose(0, 2, 1, 3).astype(mm_dtype)

    enc["wq"] = split_heads(wq)
    enc["wk"] = split_heads(wk)
    enc["wv"] = split_heads(wv)
    enc["wo"] = jnp.stack(wo).astype(mm_dtype)       # full (L, H*dk, D)
    enc["w1"] = jnp.stack(w1).astype(mm_dtype)
    enc["w2"] = jnp.stack(w2).astype(mm_dtype)
    params["encoders"] = enc

    params["head"] = {
        "lnw": jnp.ones((1, D), jnp.float32),
        "lnb": jnp.zeros((1, D), jnp.float32),
        "w": lin_w(next(keys), D, n_class).astype(mm_dtype),
        "b": jnp.zeros((1, n_class), jnp.float32),
    }
    return params


# -------------------------------------------------------------------------
# Full ViT forward
# -------------------------------------------------------------------------
def vit_forward(x, params, *, patch_size, n_heads, return_attentions=True):
    B, C, H, W = x.shape
    P = patch_size
    Hp, Wp = H // P, W // P
    Np = Hp * Wp
    D = params["pos_emb"].shape[-1]
    S = Np + 1
    mm_dtype = params["patch_w"].dtype
    attn_dtype = jnp.bfloat16

    # im2col glue in plain JAX: (B*Np, C*P*P); patch order row-major over
    # (Hp, Wp), feature order (c, ph, pw) — matches Conv2d + flatten(2).T
    patches = x.reshape(B, C, Hp, P, Wp, P).transpose(0, 2, 4, 1, 3, 5)
    patches = patches.reshape(B * Np, C * P * P).astype(mm_dtype)

    emb = patch_embed(patches, params["patch_w"], params["patch_b"])
    emb = emb.reshape(B, Np, D)

    cls = jnp.broadcast_to(params["cls_token"], (B, 1, D))
    tokens = jnp.concatenate([cls, emb], axis=1)      # pos_emb added in-kernel
    # TODO(synk): cls-token concat could also be fused into patch_embed via a
    # row-offset output block; dropout layers are identity (inference mode).

    # Pad the sequence to a sublane-friendly multiple of 8; padded keys are
    # masked inside the kernel and padded rows sliced off below.
    S_pad = _round_up(S, 8)
    if S_pad != S:
        tokens = jnp.pad(tokens, ((0, 0), (0, S_pad - S), (0, 0)))
        pos = jnp.pad(params["pos_emb"], ((0, 0), (0, S_pad - S), (0, 0)))
    else:
        pos = params["pos_emb"]

    enc = params["encoders"]
    L = enc["wq"].shape[0]
    TB = _pick_batch_tile(B, S_pad, D, n_heads, enc, return_attentions,
                          jnp.dtype(attn_dtype).itemsize)
    B_pad = pl.cdiv(B, TB) * TB
    if B_pad != B:
        tokens = jnp.pad(tokens, ((0, B_pad - B), (0, 0), (0, 0)))

    out, attn = encoder_stack(tokens, pos, enc, n_heads, s_valid=S,
                              batch_tile=TB, emit_attn=return_attentions,
                              attn_dtype=attn_dtype)

    cls_out = out[:B, 0]                              # (B, D)
    hp = params["head"]
    logits = mlp_head(cls_out, hp["lnw"], hp["lnb"], hp["w"], hp["b"])

    attentions = []
    if return_attentions:
        attn = attn[:, :B, :, :S, :S]                 # drop batch/seq padding
        attentions = [attn[i] for i in range(L)]
    return logits, attentions


if __name__ == "__main__":
    # Small ViT config
    B, C, H, W = 2, 4, 16, 16
    patch_size = 4
    num_patches = (H // patch_size) * (W // patch_size)   # 16
    emb_dim = 32
    n_heads = 4
    num_encoder = 2
    n_class = 10

    key = jax.random.PRNGKey(0)
    k_x, k_p = jax.random.split(key)
    x = jax.random.normal(k_x, (B, C, H, W), jnp.float32)
    params = init_params(k_p, C, emb_dim, patch_size, num_patches,
                         num_encoder, n_class, n_heads)

    logits, attentions = vit_forward(x, params, patch_size=patch_size,
                                     n_heads=n_heads, return_attentions=True)
    jax.block_until_ready(logits)
    for a in attentions:
        jax.block_until_ready(a)

    assert logits.shape == (B, n_class)
    assert len(attentions) == num_encoder
    assert attentions[0].shape == (B, n_heads, num_patches + 1, num_patches + 1)
    assert bool(jnp.all(jnp.isfinite(logits)))
    for a in attentions:
        assert bool(jnp.all(jnp.isfinite(a.astype(jnp.float32))))
    print("KERNEL_OK")
</pallas_src>

<mosaic_0001>
module attributes {stable_mosaic.version = 11 : i64} {
  func.func @patch_embed_kernel(%arg0: i32, %arg1: memref<32x64xbf16, #tpu.memory_space<vmem>>, %arg2: memref<64x32xbf16, #tpu.memory_space<vmem>>, %arg3: memref<1x32xf32, #tpu.memory_space<vmem>>, %arg4: memref<32x32xf32, #tpu.memory_space<vmem>>) attributes {dimension_semantics = [#tpu.dimension_semantics<parallel>], iteration_bounds = array<i64: 1>, scalar_prefetch = 0 : i64, scratch_operands = 0 : i64, tpu.core_type = #tpu.core_type<tc>, window_params = [{transform_indices = @transform_0, window_bounds = array<i64: 32, 64>}, {pipeline_mode = #tpu.pipeline_mode<synchronous>, transform_indices = @transform_1, window_bounds = array<i64: 64, 32>}, {pipeline_mode = #tpu.pipeline_mode<synchronous>, transform_indices = @transform_2, window_bounds = array<i64: 1, 32>}, {transform_indices = @transform_3, window_bounds = array<i64: 32, 32>}]} {
    %c0 = arith.constant 0 : index
    %c0_0 = arith.constant 0 : index
    %0 = vector.load %arg1[%c0, %c0_0] : memref<32x64xbf16, #tpu.memory_space<vmem>>, vector<32x64xbf16>
    %c0_1 = arith.constant 0 : index
    %c0_2 = arith.constant 0 : index
    %1 = vector.load %arg2[%c0_1, %c0_2] : memref<64x32xbf16, #tpu.memory_space<vmem>>, vector<64x32xbf16>
    %cst = arith.constant dense<0.000000e+00> : vector<32x32xf32>
    %2 = tpu.matmul %0, %1, %cst {dimension_numbers = #tpu.dot_dimension_numbers<[1], [0], [0], [1], [0, 0, 1, 1], [], []>} : vector<32x64xbf16>, vector<64x32xbf16>, vector<32x32xf32> -> vector<32x32xf32>
    %c0_3 = arith.constant 0 : index
    %c0_4 = arith.constant 0 : index
    %3 = vector.load %arg3[%c0_3, %c0_4] : memref<1x32xf32, #tpu.memory_space<vmem>>, vector<1x32xf32>
    %4 = vector.broadcast %3 : vector<1x32xf32> to vector<32x32xf32>
    %5 = arith.addf %2, %4 : vector<32x32xf32>
    %c0_5 = arith.constant 0 : index
    %c0_6 = arith.constant 0 : index
    %6 = vector.load %arg4[%c0_5, %c0_6] : memref<32x32xf32, #tpu.memory_space<vmem>>, vector<32x32xf32>
    tpu.vector_store %arg4[%c0_5, %c0_6], %5 {strides = array<i32>} : memref<32x32xf32, #tpu.memory_space<vmem>>, vector<32x32xf32>,
    return
  }
  func.func @transform_0(%arg0: i32) -> (i32, i32) {
    %c0_i32 = arith.constant 0 : i32
    %c0_i32_0 = arith.constant 0 : i32
    return %arg0, %c0_i32 : i32, i32
  }
  func.func @transform_1(%arg0: i32) -> (i32, i32) {
    %c0_i32 = arith.constant 0 : i32
    %c0_i32_0 = arith.constant 0 : i32
    %c0_i32_1 = arith.constant 0 : i32
    return %c0_i32, %c0_i32_0 : i32, i32
  }
  func.func @transform_2(%arg0: i32) -> (i32, i32) {
    %c0_i32 = arith.constant 0 : i32
    %c0_i32_0 = arith.constant 0 : i32
    %c0_i32_1 = arith.constant 0 : i32
    return %c0_i32, %c0_i32_0 : i32, i32
  }
  func.func @transform_3(%arg0: i32) -> (i32, i32) {
    %c0_i32 = arith.constant 0 : i32
    %c0_i32_0 = arith.constant 0 : i32
    return %arg0, %c0_i32 : i32, i32
  }
}

</mosaic_0001>

<llo_original>
// kernel: tpu_custom_call.1
$region0: #{tpu_custom_call.1}
  #allocation0 [shape = 'u32[]', space=smem, size = 0x4, offset = 0x4, fixed_abs, tag = 'smem constant byte address 0x4 - core index']
  #allocation1 [shape = 'u32[144,128]{1,0:T(1,128)}', space=vmem, size = 0x12000, scoped, tag = 'internal scratch']
  %s0 = inlined_call_operand.vmem [shape: bf16[32,64], index: 0, kind: input, shape index: {}]
  %s1 = inlined_call_operand.vmem [shape: bf16[64,32], index: 1, kind: input, shape index: {}]
  %s2 = inlined_call_operand.vmem [shape: f32[1,32], index: 2, kind: input, shape index: {}]
  %s3 = inlined_call_operand.hbm [shape: f32[32,32], index: 3, kind: output, shape index: {}]
  %s4 = sld [smem:[#allocation0]]
  $region22: #{tpu_custom_call.1} parent=0
    _
  %s6 = ssub.s32 1, %s4
  %s7 = scalar_select 0, %s6, %s4
  $region1: #{tpu_custom_call.1} parent=0
    #allocation2 [shape = 'u8[16384]{0}', space=vmem, size = 0x4000, scoped, tag = 'output window, operand 0, single buffered']
    #allocation3 [shape = 's32[1]{0}', space=sflag, size = 0x4, scoped, tag = 'scoped memory for tpu_custom_call.1']
    %8 = vsyncpa [#allocation3], 0
    // Predicated region
    $region2: #{tpu_custom_call.1} parent=1 // pred_check
      _
    $region3: #{tpu_custom_call.1} parent=1 // pred_check_branch
      %10 = sbr.rel (0) target = $region5
    $region4: #{tpu_custom_call.1} parent=1 // pred_region
      _
    $region5: #{tpu_custom_call.1} parent=1 // pred_fallthru
      _
    // Predicated region
    $region6: #{tpu_custom_call.1} parent=1 // pred_check
      _
    $region7: #{tpu_custom_call.1} parent=1 // pred_check_branch
      %12 = sbr.rel (0) target = $region9
    $region8: #{tpu_custom_call.1} parent=1 // pred_region
      _
    $region9: #{tpu_custom_call.1} parent=1 // pred_fallthru
      _
    // Predicated region
    $region10: #{tpu_custom_call.1} parent=1 // pred_check
      _
    $region11: #{tpu_custom_call.1} parent=1 // pred_check_branch
      %14 = sbr.rel (0) target = $region13
    $region12: #{tpu_custom_call.1} parent=1 // pred_region
      _
    $region13: #{tpu_custom_call.1} parent=1 // pred_fallthru
      _
    %v16 = vld [vmem:[%s0] sm:$0xf]
    %v17 = vld [vmem:[%s0 + $0x4] sm:$0xf]
    %v18 = vld [vmem:[%s0 + $0x8] sm:$0xf]
    %v19 = vld [vmem:[%s0 + $0xc] sm:$0xf]
    %v20 = vld [vmem:[%s1] sm:$0xf]
    %v21 = vld [vmem:[%s1 + $0x4] sm:$0xf]
    %v22 = vld [vmem:[%s1 + $0x8] sm:$0xf]
    %v23 = vld [vmem:[%s1 + $0xc] sm:$0xf]
    %v24 = vld [vmem:[%s1 + $0x10] sm:$0xf]
    %v25 = vld [vmem:[%s1 + $0x14] sm:$0xf]
    %v26 = vld [vmem:[%s1 + $0x18] sm:$0xf]
    %v27 = vld [vmem:[%s1 + $0x1c] sm:$0xf]
    %v28 = vld [vmem:[%s2] sm:$0x1]
    %v30 = vlaneseq
    %v31 = vshrl.u32 %v30, 7
    %v32 = vsub.s32 0, %v31
    %v33 = vrot.slane %v28, %v32
    %v39 = vunpack.c.l.b16 %v16
    %v40 = vunpack.c.l.b16 %v17
    %v41 = vunpack.c.l.b16 %v18
    %v42 = vunpack.c.l.b16 %v19
    %v43 = vpack.c.b16 %v40, %v39
    %v44 = vpack.c.b16 %v42, %v41
    %v53 = vunpack.c.l.b16 %v20
    %v54 = vunpack.c.l.b16 %v21
    %v55 = vunpack.c.l.b16 %v22
    %v56 = vunpack.c.l.b16 %v23
    %v57 = vunpack.c.l.b16 %v24
    %v58 = vunpack.c.l.b16 %v25
    %v59 = vunpack.c.l.b16 %v26
    %v60 = vunpack.c.l.b16 %v27
    %v61 = vpack.c.b16 %v54, %v53
    %v62 = vpack.c.b16 %v56, %v55
    %v63 = vpack.c.b16 %v58, %v57
    %v64 = vpack.c.b16 %v60, %v59
    %vm69 = vcmask 523264
    %v71 = vsel %vm69, %v43, 0
    %v74 = vsel %vm69, %v44, 0
    %76 = vmatprep.subr.bf16.mxu0 0
    %77 = vmatpush1.bf16.msra.mxu0 0
    %78 = vmatprep.subr.bf16.mxu0 0
    %79 = vmatpush1.bf16.msra.mxu0 0
    %80 = vmatprep.subr.bf16.mxu0 0
    %81 = vmatpush1.bf16.msra.mxu0 0
    %82 = vmatprep.subr.bf16.mxu0 0
    %83 = vmatpush1.bf16.msra.mxu0 0
    %84 = vmatprep.subr.bf16.mxu0 0
    %85 = vmatpush1.bf16.msra.mxu0 %v64
    %86 = vmatprep.subr.bf16.mxu0 0
    %87 = vmatpush1.bf16.msra.mxu0 %v63
    %88 = vmatprep.subr.bf16.mxu0 0
    %89 = vmatpush1.bf16.msra.mxu0 %v62
    %90 = vmatprep.subr.bf16.mxu0 0
    %91 = vmatpush1.bf16.msra.mxu0 %v61
    %92 = vmatprep.subr.bf16.mxu0 0
    %93 = vmatpush2.bf16.msra.mxu0 0
    %94 = vmatprep.subr.bf16.mxu0 0
    %95 = vmatpush2.bf16.msra.mxu0 0
    %96 = vmatprep.subr.bf16.mxu0 0
    %97 = vmatpush2.bf16.msra.mxu0 0
    %98 = vmatprep.subr.bf16.mxu0 0
    %99 = vmatpush2.bf16.msra.mxu0 0
    %100 = vmatprep.subr.bf16.mxu0 0
    %101 = vmatpush2.bf16.msra.mxu0 0
    %102 = vmatprep.subr.bf16.mxu0 0
    %103 = vmatpush2.bf16.msra.mxu0 0
    %104 = vmatprep.subr.bf16.mxu0 0
    %105 = vmatpush2.bf16.msra.mxu0 0
    %106 = vmatprep.subr.bf16.mxu0 0
    %107 = vmatpush2.bf16.msra.mxu0 0
    %108 = vmatprep.mubr.bf16.mxu0 0
    %109 = vmatmul.mubr.bf16.gmra.mxu0 %v71
    %v110 = vpop.f32.mrf.mxu0
    %v111 = vadd.f32 %v33, %v110
    %v112 = vpop.f32.mrf.mxu0
    %v113 = vpop.f32.mrf.mxu0
    %v114 = vadd.f32 %v33, %v113
    %v115 = vpop.f32.mrf.mxu0
    %116 = vmatprep.mubr.bf16.mxu0 0
    %117 = vmatmul.mubr.bf16.gmra.mxu0 %v74
    %v118 = vpop.f32.mrf.mxu0
    %v119 = vadd.f32 %v33, %v118
    %v120 = vpop.f32.mrf.mxu0
    %v121 = vpop.f32.mrf.mxu0
    %v122 = vadd.f32 %v33, %v121
    %v123 = vpop.f32.mrf.mxu0
    %124 = vdwg.mxu0
    %vm125 = vcmask 261120
    %126 = vst.msk [vmem:[#allocation2] sm:$0xff] %vm125, %v111
    %127 = vst.msk [vmem:[#allocation2 + $0x8] sm:$0xff] %vm125, %v114
    %128 = vst.msk [vmem:[#allocation2 + $0x10] sm:$0xff] %vm125, %v119
    %129 = vst.msk [vmem:[#allocation2 + $0x18] sm:$0xff] %vm125, %v122
    // Predicated region
    $region14: #{tpu_custom_call.1} parent=1 // pred_check
      _
    $region15: #{tpu_custom_call.1} parent=1 // pred_check_branch
      %131 = sbr.rel (0) target = $region17
    $region16: #{tpu_custom_call.1} parent=1 // pred_region
      %s133 = ssub.s32 512, 512
      %134 = vsyncadd [#allocation3], %s133
      %s135 = sshll.u32 [#allocation2], 4
      %s136 = int_to_ptr.vmem [resolvable:$true] %s135
      %141 = dma.vmem_to_hbm [thread:$0]  %s136, 512, %s3, [#allocation3], 128, 128, 8
    $region17: #{tpu_custom_call.1} parent=1 // pred_fallthru
      _
    // Predicated region
    $region18: #{tpu_custom_call.1} parent=1 // pred_check
      _
    $region19: #{tpu_custom_call.1} parent=1 // pred_check_branch
      %143 = sbr.rel (0) target = $region21
    $region20: #{tpu_custom_call.1} parent=1 // pred_region
      %144 = dma.done [#allocation3], 512
    $region21: #{tpu_custom_call.1} parent=1 // pred_fallthru
      _
    %145 = vsyncpa [#allocation3], 1

</llo_original>
